<compile_context>
chip_gen: v7x
topology: tpu7x:2x2x1
jax: 0.10.0
libtpu: 0.0.40
codegen_flags: <defaults>
</compile_context>

<pallas_src>
import jax
import jax.numpy as jnp
from jax.experimental import pallas as pl
from jax.experimental.pallas import tpu as pltpu


_TARGET_BLOCK_BYTES = 2 * 1024 * 1024   # ~2 MiB blocks: near HBM roofline,
                                        # 4x resident (in+out double-buffered)
                                        # = 8 MiB, safe on v7x 32 MiB scoped VMEM.


def _sublane_for(dtype) -> int:
    """Dtype-native sublane multiple (sub-32-bit dtypes pack along sublanes)."""
    itemsize = jnp.dtype(dtype).itemsize
    if itemsize >= 4:
        return 8
    if itemsize == 2:
        return 16
    return 32


def _coeff_copy_kernel(coeff_ref, out_ref):
    # Single straight-line copy.  No pl.when / loops / scratch: the op is
    # overhead-bound, extra structure only hurts.
    out_ref[...] = coeff_ref[...]


def _coeff_identity_pallas(coeff: jnp.ndarray) -> jnp.ndarray:
    """Identity forward expressed as a Pallas copy (no pad, no slice)."""
    orig_shape = coeff.shape
    dtype = coeff.dtype

    # Flatten to 2D [rows, features] (free for contiguous arrays).
    if coeff.ndim == 0:
        coeff2d = coeff.reshape(1, 1)
    elif coeff.ndim == 1:
        coeff2d = coeff.reshape(1, -1)
    else:
        coeff2d = coeff.reshape(-1, coeff.shape[-1])
    n, d = coeff2d.shape

    itemsize = jnp.dtype(dtype).itemsize
    sublane = _sublane_for(dtype)

    # Byte-sized row tile: largest sublane multiple keeping one block near
    # the ~2 MiB target.
    rows_per_block = (_TARGET_BLOCK_BYTES // max(1, d * itemsize))
    tile_n = max(sublane, (rows_per_block // sublane) * sublane)

    if n <= tile_n:
        # Small / realistic case: one whole-array block, no grid, no padding,
        # no dimension_semantics (single step cannot be sharded anyway).
        out2d = pl.pallas_call(
            _coeff_copy_kernel,
            out_shape=jax.ShapeDtypeStruct((n, d), dtype),
            in_specs=[pl.BlockSpec(memory_space=pltpu.MemorySpace.VMEM)],
            out_specs=pl.BlockSpec(memory_space=pltpu.MemorySpace.VMEM),
        )(coeff2d)
        return out2d.reshape(orig_shape)

    # Large case: row-tiled streaming copy.  Last block may be partial;
    # Pallas masks the edge, so no row padding / post-slice is needed.
    # Block last dim == full array dim, so no lane padding is needed either.
    num_blocks = pl.cdiv(n, tile_n)
    grid = (num_blocks,)

    call_kwargs = {}
    if num_blocks >= 2:
        # Only meaningful on v7x (2 TCs); no-op on v5e/v6e, dead weight if
        # the grid has a single step.
        call_kwargs["compiler_params"] = pltpu.CompilerParams(
            dimension_semantics=("parallel",),
        )

    out2d = pl.pallas_call(
        _coeff_copy_kernel,
        out_shape=jax.ShapeDtypeStruct((n, d), dtype),
        grid=grid,
        in_specs=[pl.BlockSpec((tile_n, d), lambda i: (i, 0))],
        out_specs=pl.BlockSpec((tile_n, d), lambda i: (i, 0)),
        **call_kwargs,
    )(coeff2d)
    return out2d.reshape(orig_shape)


class CoeffFirstModel:
    """JAX/Pallas equivalent of the PyTorch CoeffFirstModel."""

    def __init__(self, coeff_first):
        # Deterministic "parameter" stored at construction time.
        self.coeff_first = jnp.asarray(coeff_first)

    def __call__(self, force_kernel: bool = False) -> jnp.ndarray:
        if not force_kernel:
            # forward() is a pure identity: do not launch a kernel at all.
            return self.coeff_first
        # Explicit device-kernel boundary requested.
        return _coeff_identity_pallas(self.coeff_first)


if __name__ == "__main__":
    # Shapes consistent with visualize.py usage: per-frame 3DMM coefficients,
    # e.g. [num_frames, 70].
    num_frames, coeff_dim = 8, 70

    key = jax.random.PRNGKey(0)
    coeff_first = jax.random.normal(key, (num_frames, coeff_dim), dtype=jnp.float32)

    model = CoeffFirstModel(coeff_first)

    # Default (optimized) forward: returns the stored tensor directly.
    out_fast = jax.block_until_ready(model())
    assert out_fast.shape == coeff_first.shape
    assert out_fast.dtype == coeff_first.dtype
    assert bool(jnp.array_equal(out_fast, coeff_first))

    # Forced-kernel path, small case: single whole-array block, no grid.
    out_kernel = jax.block_until_ready(model(force_kernel=True))
    assert out_kernel.shape == coeff_first.shape
    assert out_kernel.dtype == coeff_first.dtype
    assert bool(jnp.array_equal(out_kernel, coeff_first))

    # Forced-kernel path, tiled case: exercises byte-sized row tiles, a
    # partial (masked) final block, and the >=2-step parallel grid.
    key2 = jax.random.PRNGKey(1)
    big = jax.random.normal(key2, (2051, 512), dtype=jnp.float32)
    big_model = CoeffFirstModel(big)
    out_big = jax.block_until_ready(big_model(force_kernel=True))
    assert out_big.shape == big.shape
    assert out_big.dtype == big.dtype
    assert bool(jnp.array_equal(out_big, big))

    print("KERNEL_OK")
</pallas_src>

<mosaic_0001>
module attributes {stable_mosaic.version = 11 : i64} {
  func.func @_coeff_copy_kernel(%arg0: memref<8x70xf32, #tpu.memory_space<vmem>>, %arg1: memref<8x70xf32, #tpu.memory_space<vmem>>) attributes {dimension_semantics = [], scalar_prefetch = 0 : i64, scratch_operands = 0 : i64, tpu.core_type = #tpu.core_type<tc>} {
    %c0 = arith.constant 0 : index
    %c0_0 = arith.constant 0 : index
    %0 = vector.load %arg0[%c0, %c0_0] : memref<8x70xf32, #tpu.memory_space<vmem>>, vector<8x70xf32>
    %c0_1 = arith.constant 0 : index
    %c0_2 = arith.constant 0 : index
    %1 = vector.load %arg1[%c0_1, %c0_2] : memref<8x70xf32, #tpu.memory_space<vmem>>, vector<8x70xf32>
    tpu.vector_store %arg1[%c0_1, %c0_2], %0 {strides = array<i32>} : memref<8x70xf32, #tpu.memory_space<vmem>>, vector<8x70xf32>,
    return
  }
}

</mosaic_0001>

<llo_original>
// kernel: tpu_custom_call.1
$region0: #{tpu_custom_call.1}
  #allocation0 [shape = 'u32[]', space=smem, size = 0x4, offset = 0x4, fixed_abs, tag = 'smem constant byte address 0x4 - core index']
  #allocation1 [shape = 'u32[144,128]{1,0:T(1,128)}', space=vmem, size = 0x12000, scoped, tag = 'internal scratch']
  %s0 = inlined_call_operand.hbm [shape: f32[8,70], index: 0, kind: input, shape index: {}]
  %s1 = inlined_call_operand.hbm [shape: f32[8,70], index: 1, kind: output, shape index: {}]
  %s2 = sld [smem:[#allocation0]]
  $region18: #{tpu_custom_call.1} parent=0
    _
  %s4 = ssub.s32 1, %s2
  %s5 = scalar_select 0, %s4, %s2
  $region1: #{tpu_custom_call.1} parent=0
    #allocation2 [shape = 'u8[4096]{0}', space=vmem, size = 0x1000, scoped, tag = 'input window, operand 0, single buffered']
    #allocation3 [shape = 's32[1]{0}', space=sflag, size = 0x4, scoped, tag = 'scoped memory for tpu_custom_call.1']
    #allocation4 [shape = 's32[1]{0}', space=sflag, size = 0x4, scoped, tag = 'scoped memory for tpu_custom_call.1']
    #allocation5 [shape = 'u8[4096]{0}', space=vmem, size = 0x1000, scoped, tag = 'output window, operand 0, single buffered']
    %6 = vsyncpa [#allocation3], 0
    %7 = vsyncpa [#allocation4], 0
    // Predicated region
    $region2: #{tpu_custom_call.1} parent=1 // pred_check
      _
    $region3: #{tpu_custom_call.1} parent=1 // pred_check_branch
      %9 = sbr.rel (0) target = $region5
    $region4: #{tpu_custom_call.1} parent=1 // pred_region
      %s11 = ssub.s32 128, 128
      %12 = vsyncadd [#allocation3], %s11
      %s14 = sshll.u32 [#allocation2], 4
      %s15 = int_to_ptr.vmem [resolvable:$true] %s14
      %17 = dma.hbm_to_vmem [thread:$0]  %s0, 128, %s15, [#allocation3]
    $region5: #{tpu_custom_call.1} parent=1 // pred_fallthru
      _
    // Predicated region
    $region6: #{tpu_custom_call.1} parent=1 // pred_check
      _
    $region7: #{tpu_custom_call.1} parent=1 // pred_check_branch
      %19 = sbr.rel (0) target = $region9
    $region8: #{tpu_custom_call.1} parent=1 // pred_region
      %20 = dma.done [#allocation3], 128
    $region9: #{tpu_custom_call.1} parent=1 // pred_fallthru
      _
    %v21 = vld [vmem:[#allocation2] sm:$0xff]
    %vm22 = vcmask 572416
    %23 = vst.msk [vmem:[#allocation5] sm:$0xff] %vm22, %v21
    // Predicated region
    $region10: #{tpu_custom_call.1} parent=1 // pred_check
      _
    $region11: #{tpu_custom_call.1} parent=1 // pred_check_branch
      %25 = sbr.rel (0) target = $region13
    $region12: #{tpu_custom_call.1} parent=1 // pred_region
      %s27 = ssub.s32 128, 128
      %28 = vsyncadd [#allocation4], %s27
      %s30 = sshll.u32 [#allocation5], 4
      %s31 = int_to_ptr.vmem [resolvable:$true] %s30
      %33 = dma.vmem_to_hbm [thread:$0]  %s31, 128, %s1, [#allocation4]
    $region13: #{tpu_custom_call.1} parent=1 // pred_fallthru
      _
    // Predicated region
    $region14: #{tpu_custom_call.1} parent=1 // pred_check
      _
    $region15: #{tpu_custom_call.1} parent=1 // pred_check_branch
      %35 = sbr.rel (0) target = $region17
    $region16: #{tpu_custom_call.1} parent=1 // pred_region
      %36 = dma.done [#allocation4], 128
    $region17: #{tpu_custom_call.1} parent=1 // pred_fallthru
      _
    %37 = vsyncpa [#allocation3], 1
    %38 = vsyncpa [#allocation4], 1

</llo_original>
